<compile_context>
chip_gen: v7x
topology: tpu7x:2x2x1
jax: 0.10.0
libtpu: 0.0.40
codegen_flags: <defaults>
</compile_context>

<pallas_src>
import numpy as np
import jax
import jax.numpy as jnp
from jax.experimental import pallas as pl
from jax.experimental.pallas import tpu as pltpu


def _ceil_div(a, b):
    return -(-a // b)


def _round_up(a, b):
    return _ceil_div(a, b) * b


def _build_w_select(W, dtype):
    """S_w[w, j] = 1 iff w == 2*j : x[..., ::2] as one tiny lane-compaction matmul."""
    W2 = _ceil_div(W, 2)               # ceil, matches PyTorch ::2
    S = np.zeros((W, W2), dtype=dtype)
    S[2 * np.arange(W2), np.arange(W2)] = 1
    return S, W2


def _make_kernel(Nb, C, pad, H2, W, W2, even_h):
    def kernel(x_ref, s_ref, o_ref):
        # x_ref: (Nb, C, H2, 2*W) [even H] or (Nb, C, H, W) [odd H]
        # s_ref: (W, W2)  -- tiny constant, VMEM resident
        # o_ref: (Nb, C + 2*pad, H2, W2)
        if even_h:
            # Even rows are the first W lanes of each row-pair (static lane slice).
            xe = x_ref[:, :, :, :W]                          # (Nb, C, H2, W)
        else:
            # Sublane-strided read of even rows (replacement for strided_load).
            xe = x_ref[:, :, pl.ds(0, H2, 2), :]             # (Nb, C, H2, W)

        # Leading-dims-only merge (free when H2 % 8 == 0); lane dim W untouched.
        x2 = xe.reshape(Nb * C * H2, W)
        # Tiny 0/1 lane-compaction matmul: exact in f32/bf16 (one nonzero per column).
        sub = jnp.dot(x2.astype(s_ref.dtype), s_ref[...],
                      preferred_element_type=jnp.float32)    # (Nb*C*H2, W2)
        # Leading split only; W2 stays the minor dim (no lane-merge relayout).
        sub = sub.reshape(Nb, C, H2, W2).astype(o_ref.dtype)

        if pad > 0:
            # Channel zero-pad fused into ONE full-block store; the channel axis is a
            # leading dim of the 4-D block, so no sublane-masked band stores occur.
            z = jnp.zeros((Nb, pad, H2, W2), o_ref.dtype)
            o_ref[...] = jnp.concatenate([z, sub, z], axis=1)
        else:
            o_ref[...] = sub

    return kernel


def lambda_layer(x, planes, *, max_block_bytes=2 << 20):
    """Forward of LambdaLayer with the ResNet option-A shortcut lambda."""
    N, C, H, W = x.shape
    pad = planes // 4
    C_out = C + 2 * pad
    H2 = _ceil_div(H, 2)
    even_h = (H % 2 == 0)

    s_dtype = x.dtype if jnp.issubdtype(x.dtype, jnp.floating) else jnp.float32
    S_np, W2 = _build_w_select(W, np.dtype(s_dtype))
    S = jnp.asarray(S_np)

    # --- block sizing -------------------------------------------------------
    # Count VMEM bytes with (8, 128) tile padding so the estimate is honest for
    # narrow lane dims, and cap Nb so the grid keeps >= ~4 steps (v7x megacore
    # sharding + pipeline depth).  cdiv grid handles non-dividing N (no Nb=1 cliff).
    itemsize = jnp.dtype(x.dtype).itemsize
    in_sub, in_lane = (H2, 2 * W) if even_h else (H, W)
    per_ex_in = C * _round_up(in_sub, 8) * _round_up(in_lane, 128) * itemsize
    per_ex_out = C_out * _round_up(H2, 8) * _round_up(W2, 128) * itemsize
    per_ex = max(1, per_ex_in + per_ex_out)
    Nb = max(1, min(N, max_block_bytes // per_ex))
    Nb = min(Nb, max(1, pl.cdiv(N, 4)))
    grid = (pl.cdiv(N, Nb),)

    if even_h:
        # Free reshape (pure dim split/merge of contiguous data): groups row pairs so
        # the even row is the first W lanes -> no strided access needed in the kernel.
        x_in = x.reshape(N, C, H2, 2 * W)
        x_block = (Nb, C, H2, 2 * W)
    else:
        x_in = x
        x_block = (Nb, C, H, W)

    kernel = _make_kernel(Nb, C, pad, H2, W, W2, even_h)

    out = pl.pallas_call(
        kernel,
        out_shape=jax.ShapeDtypeStruct((N, C_out, H2, W2), x.dtype),
        grid_spec=pltpu.PrefetchScalarGridSpec(
            num_scalar_prefetch=0,
            grid=grid,
            in_specs=[
                pl.BlockSpec(x_block, lambda n: (n, 0, 0, 0)),
                pl.BlockSpec((W, W2), lambda n: (0, 0)),     # tiny constant, DMA'd once
            ],
            out_specs=pl.BlockSpec((Nb, C_out, H2, W2), lambda n: (n, 0, 0, 0)),
        ),
        compiler_params=pltpu.CompilerParams(
            dimension_semantics=("parallel",),
            vmem_limit_bytes=32 * 1024 * 1024,
        ),
    )(x_in, S)

    return out


def _reference(x, planes):
    pad = planes // 4
    return jnp.pad(x[:, :, ::2, ::2], ((0, 0), (pad, pad), (0, 0), (0, 0)))


if __name__ == "__main__":
    key = jax.random.PRNGKey(0)

    # Small shape consistent with module usage: NCHW, planes doubles channels.
    N, C, H, W = 2, 4, 16, 16
    planes = 8                                     # pad = 2, C_out = 8, spatial 8x8
    x = jax.random.normal(key, (N, C, H, W), dtype=jnp.float32)
    out = jax.block_until_ready(lambda_layer(x, planes))
    ref = _reference(x, planes)
    assert out.shape == ref.shape, (out.shape, ref.shape)
    assert np.allclose(np.asarray(out), np.asarray(ref), atol=1e-6)

    # A more realistic CIFAR-like shape (>= 4 grid steps, 16x16 spatial output).
    N2, C2, H2s, W2s = 4, 16, 32, 32
    planes2 = 32                                   # pad = 8, C_out = 32, spatial 16x16
    x2 = jax.random.normal(jax.random.PRNGKey(1), (N2, C2, H2s, W2s), dtype=jnp.float32)
    out2 = jax.block_until_ready(lambda_layer(x2, planes2))
    ref2 = _reference(x2, planes2)
    assert out2.shape == ref2.shape, (out2.shape, ref2.shape)
    assert np.allclose(np.asarray(out2), np.asarray(ref2), atol=1e-6)

    print("KERNEL_OK")
</pallas_src>

<mosaic_0001>
module attributes {stable_mosaic.version = 11 : i64} {
  func.func @kernel(%arg0: i32, %arg1: memref<1x4x8x32xf32, #tpu.memory_space<vmem>>, %arg2: memref<16x8xf32, #tpu.memory_space<vmem>>, %arg3: memref<1x8x8x8xf32, #tpu.memory_space<vmem>>) attributes {dimension_semantics = [#tpu.dimension_semantics<parallel>], iteration_bounds = array<i64: 2>, scalar_prefetch = 0 : i64, scratch_operands = 0 : i64, tpu.core_type = #tpu.core_type<tc>, window_params = [{transform_indices = @transform_0, window_bounds = array<i64: 1, 4, 8, 32>}, {pipeline_mode = #tpu.pipeline_mode<synchronous>, transform_indices = @transform_1, window_bounds = array<i64: 16, 8>}, {transform_indices = @transform_2, window_bounds = array<i64: 1, 8, 8, 8>}]} {
    %c0 = arith.constant 0 : index
    %c0_0 = arith.constant 0 : index
    %c0_1 = arith.constant 0 : index
    %c0_2 = arith.constant 0 : index
    %0 = vector.load %arg1[%c0, %c0_0, %c0_1, %c0_2] : memref<1x4x8x32xf32, #tpu.memory_space<vmem>>, vector<1x4x8x16xf32>
    %1 = vector.shape_cast %0 : vector<1x4x8x16xf32> to vector<32x16xf32>
    %c0_3 = arith.constant 0 : index
    %c0_4 = arith.constant 0 : index
    %2 = vector.load %arg2[%c0_3, %c0_4] : memref<16x8xf32, #tpu.memory_space<vmem>>, vector<16x8xf32>
    %cst = arith.constant dense<0.000000e+00> : vector<32x8xf32>
    %3 = tpu.matmul %1, %2, %cst {dimension_numbers = #tpu.dot_dimension_numbers<[1], [0], [0], [1], [0, 0, 1, 1], [], []>} : vector<32x16xf32>, vector<16x8xf32>, vector<32x8xf32> -> vector<32x8xf32>
    %4 = vector.shape_cast %3 : vector<32x8xf32> to vector<1x4x8x8xf32>
    %cst_5 = arith.constant 0.000000e+00 : f32
    %5 = vector.broadcast %cst_5 : f32 to vector<1x2x8x8xf32>
    %6 = tpu.concatenate %5, %4, %5 in 1 : vector<1x2x8x8xf32>, vector<1x4x8x8xf32>, vector<1x2x8x8xf32> -> vector<1x8x8x8xf32>
    %c0_6 = arith.constant 0 : index
    %c0_7 = arith.constant 0 : index
    %c0_8 = arith.constant 0 : index
    %c0_9 = arith.constant 0 : index
    %7 = vector.load %arg3[%c0_6, %c0_7, %c0_8, %c0_9] : memref<1x8x8x8xf32, #tpu.memory_space<vmem>>, vector<1x8x8x8xf32>
    tpu.vector_store %arg3[%c0_6, %c0_7, %c0_8, %c0_9], %6 {strides = array<i32>} : memref<1x8x8x8xf32, #tpu.memory_space<vmem>>, vector<1x8x8x8xf32>,
    return
  }
  func.func @transform_0(%arg0: i32) -> (i32, i32, i32, i32) {
    %c0_i32 = arith.constant 0 : i32
    %c0_i32_0 = arith.constant 0 : i32
    %c0_i32_1 = arith.constant 0 : i32
    %c0_i32_2 = arith.constant 0 : i32
    return %arg0, %c0_i32, %c0_i32_0, %c0_i32_1 : i32, i32, i32, i32
  }
  func.func @transform_1(%arg0: i32) -> (i32, i32) {
    %c0_i32 = arith.constant 0 : i32
    %c0_i32_0 = arith.constant 0 : i32
    %c0_i32_1 = arith.constant 0 : i32
    return %c0_i32, %c0_i32_0 : i32, i32
  }
  func.func @transform_2(%arg0: i32) -> (i32, i32, i32, i32) {
    %c0_i32 = arith.constant 0 : i32
    %c0_i32_0 = arith.constant 0 : i32
    %c0_i32_1 = arith.constant 0 : i32
    %c0_i32_2 = arith.constant 0 : i32
    return %arg0, %c0_i32, %c0_i32_0, %c0_i32_1 : i32, i32, i32, i32
  }
}

</mosaic_0001>

<llo_original>
// kernel: tpu_custom_call.1
$region0: #{tpu_custom_call.1}
  #allocation0 [shape = 'u32[]', space=smem, size = 0x4, offset = 0x4, fixed_abs, tag = 'smem constant byte address 0x4 - core index']
  #allocation1 [shape = 'u32[144,128]{1,0:T(1,128)}', space=vmem, size = 0x12000, scoped, tag = 'internal scratch']
  %s0 = inlined_call_operand.hbm [shape: f32[2,4,8,32], index: 0, kind: input, shape index: {}]
  %s1 = inlined_call_operand.vmem [shape: f32[16,8], index: 1, kind: input, shape index: {}]
  %s2 = inlined_call_operand.hbm [shape: f32[2,8,8,8], index: 2, kind: output, shape index: {}]
  %s3 = sld [smem:[#allocation0]]
  $region45: #{tpu_custom_call.1} parent=0
    _
  %s5 = ssub.s32 1, %s3
  %s6 = scalar_select 0, %s5, %s3
  $region1: #{tpu_custom_call.1} parent=0
    #allocation2 [shape = 'u8[32768]{0}', space=vmem, size = 0x8000, scoped, tag = 'input window, operand 0']
    #allocation3 [shape = 's32[2]{0}', space=sflag, size = 0x8, scoped, tag = 'scoped memory for tpu_custom_call.1']
    #allocation4 [shape = 's32[2]{0}', space=sflag, size = 0x8, scoped, tag = 'scoped memory for tpu_custom_call.1']
    #allocation5 [shape = 'u8[65536]{0}', space=vmem, size = 0x10000, scoped, tag = 'output window, operand 0']
    %7 = vsyncpa [#allocation3], 0
    %s8 = scalar_lea.sflag [#allocation3], 1
    %9 = vsyncpa %s8, 0
    %10 = vsyncpa [#allocation4], 0
    %s11 = scalar_lea.sflag [#allocation4], 1
    %12 = vsyncpa %s11, 0
    loop: start=0, step=1, limit=4
    $region2: #{tpu_custom_call.1} parent=1 // loop_pre_header
      _
    $region3: #{tpu_custom_call.1} parent=1 // loop_header
      %s14 = sphi 0, %s18
      %p15 = scmp.ge.s32.totalorder %s14, 4
      %s24 = sphi 0, %s26
      %s27 = sphi 0, %s24
      %s28 = sphi 0, %s27
      %s44 = sphi 0, %s28
      %s48 = sphi 0, %s48
      %s50 = sphi 0, %s48
      %s51 = sphi 0, %s50
      %s65 = sphi 0, %s51
      %s71 = sphi 0, %s73
      %s74 = sphi 0, %s71
      %s75 = sphi 0, %s74
      %s91 = sphi 0, %s75
    $region4: #{tpu_custom_call.1} parent=1 // loop_header_branch
      %17 = sbr.rel (%p15) target = $region8
    $region5: #{tpu_custom_call.1} parent=1 // loop_body
      %s19 = ssub.s32 %s14, 1
      %s20 = ssub.s32 %s14, 2
      %s21 = sadd.s32 %s14, 1
      %s22 = ssub.s32 %s14, %s21
      %p23 = scmp.eq.s32.totalorder %s22, 0
      %s25 = sadd.s32 %s24, 1
      %s26 = scalar_select %p23, %s24, %s25
      %p29 = pneg %p23
      %p30 = scmp.eq.s32.totalorder %s14, 1
      %p31 = por %p29, %p30
      %p32 = scmp.ne.s32.totalorder %s24, %s27
      %p33 = scmp.eq.s32.totalorder %s14, 0
      %p34 = por %p32, %p33
      %p35 = scmp.ne.s32.totalorder %s24, %s27
      %p36 = scmp.eq.s32.totalorder %s19, 1
      %p37 = por %p35, %p36
      %p38 = scmp.ne.s32.totalorder %s27, %s28
      %p39 = scmp.eq.s32.totalorder %s19, 0
      %p40 = por %p38, %p39
      %p41 = scmp.ne.s32.totalorder %s27, %s28
      %p42 = scmp.eq.s32.totalorder %s20, 1
      %p43 = por %p41, %p42
      %p45 = scmp.ne.s32.totalorder %s28, %s44
      %p46 = scmp.eq.s32.totalorder %s20, 0
      %p47 = por %p45, %p46
      %s49 = sadd.s32 %s48, 1
      %p52 = scmp.eq.s32.totalorder %s14, 1
      %p53 = scmp.ne.s32.totalorder %s48, %s50
      %p54 = scmp.eq.s32.totalorder %s14, 0
      %p55 = por %p53, %p54
      %p56 = scmp.ne.s32.totalorder %s48, %s50
      %p57 = scmp.eq.s32.totalorder %s19, 1
      %p58 = por %p56, %p57
      %p59 = scmp.ne.s32.totalorder %s50, %s51
      %p60 = scmp.eq.s32.totalorder %s19, 0
      %p61 = por %p59, %p60
      %p62 = scmp.ne.s32.totalorder %s50, %s51
      %p63 = scmp.eq.s32.totalorder %s20, 1
      %p64 = por %p62, %p63
      %p66 = scmp.ne.s32.totalorder %s51, %s65
      %p67 = scmp.eq.s32.totalorder %s20, 0
      %p68 = por %p66, %p67
      %s69 = ssub.s32 %s14, %s21
      %p70 = scmp.eq.s32.totalorder %s69, 0
      %s72 = sadd.s32 %s71, 1
      %s73 = scalar_select %p70, %s71, %s72
      %p76 = pneg %p70
      %p77 = scmp.eq.s32.totalorder %s14, 1
      %p78 = por %p76, %p77
      %p79 = scmp.ne.s32.totalorder %s71, %s74
      %p80 = scmp.eq.s32.totalorder %s14, 0
      %p81 = por %p79, %p80
      %p82 = scmp.ne.s32.totalorder %s71, %s74
      %p83 = scmp.eq.s32.totalorder %s19, 1
      %p84 = por %p82, %p83
      %p85 = scmp.ne.s32.totalorder %s74, %s75
      %p86 = scmp.eq.s32.totalorder %s19, 0
      %p87 = por %p85, %p86
      %p88 = scmp.ne.s32.totalorder %s74, %s75
      %p89 = scmp.eq.s32.totalorder %s20, 1
      %p90 = por %p88, %p89
      %p92 = scmp.ne.s32.totalorder %s75, %s91
      %p93 = scmp.eq.s32.totalorder %s20, 0
      %p94 = por %p92, %p93
      %p95 = scmp.le.s32.totalorder 1, %s14
      %p96 = scmp.lt.s32.totalorder %s14, 3
      %p97 = pnand %p95, %p96
      %p98 = pneg %p97
      // Predicated region
      $region9: #{tpu_custom_call.1} parent=5 // pred_check
        _
      $region10: #{tpu_custom_call.1} parent=5 // pred_check_branch
        %100 = sbr.rel (%p97) target = $region12
      $region11: #{tpu_custom_call.1} parent=5 // pred_region
        %s101 = ssub.s32 %s14, 1
        // Predicated region
        $region13: #{tpu_custom_call.1} parent=11 // pred_check
          %p102 = pneg %p61
        $region14: #{tpu_custom_call.1} parent=11 // pred_check_branch
          %104 = sbr.rel (%p102) target = $region16
        $region15: #{tpu_custom_call.1} parent=11 // pred_region
          _
        $region16: #{tpu_custom_call.1} parent=11 // pred_fallthru
          _
      $region12: #{tpu_custom_call.1} parent=5 // pred_fallthru
        _
      %p105 = scmp.lt.s32.totalorder %s14, 2
      // Predicated region
      $region17: #{tpu_custom_call.1} parent=5 // pred_check
        %p106 = pneg %p105
      $region18: #{tpu_custom_call.1} parent=5 // pred_check_branch
        %108 = sbr.rel (%p106) target = $region20
      $region19: #{tpu_custom_call.1} parent=5 // pred_region
        // Predicated region
        $region21: #{tpu_custom_call.1} parent=19 // pred_check
          %p109 = pneg %p34
        $region22: #{tpu_custom_call.1} parent=19 // pred_check_branch
          %111 = sbr.rel (%p109) target = $region24
        $region23: #{tpu_custom_call.1} parent=19 // pred_region
          %s112 = sand.u32 %s24, 1
          %s113 = scalar_lea.sflag [#allocation3], %s112
          %s114 = sand.u32 %s24, 1
          %s115 = smul.addr %s114, 32
          %s116 = scalar_lea.vmem [#allocation2], %s115
          %s118 = ssub.s32 512, 512
          %119 = vsyncadd %s113, %s118
          %s120 = smul.addr %s14, 4
          %s121 = smul.addr %s120, 128
          %s122 = scalar_lea.hbm %s0, %s121
          %s123 = sshll.u32 %s116, 4
          %s124 = int_to_ptr.vmem [resolvable:$true] %s123
          %129 = dma.hbm_to_vmem [thread:$0]  %s122, 512, %s124, %s113, 128, 128, 8
        $region24: #{tpu_custom_call.1} parent=19 // pred_fallthru
          _
      $region20: #{tpu_custom_call.1} parent=5 // pred_fallthru
        _
      %p130 = scmp.le.s32.totalorder 1, %s14
      %p131 = scmp.lt.s32.totalorder %s14, 3
      %p132 = pnand %p130, %p131
      %p133 = pneg %p132
      // Predicated region
      $region25: #{tpu_custom_call.1} parent=5 // pred_check
        _
      $region26: #{tpu_custom_call.1} parent=5 // pred_check_branch
        %135 = sbr.rel (%p132) target = $region28
      $region27: #{tpu_custom_call.1} parent=5 // pred_region
        %s136 = ssub.s32 %s14, 1
        %s137 = sand.u32 %s27, 1
        %s138 = scalar_lea.sflag [#allocation3], %s137
        %s139 = sand.u32 %s27, 1
        %s140 = smul.addr %s139, 32
        %s141 = scalar_lea.vmem [#allocation2], %s140
        // Predicated region
        $region29: #{tpu_custom_call.1} parent=27 // pred_check
          %p142 = pneg %p40
        $region30: #{tpu_custom_call.1} parent=27 // pred_check_branch
          %144 = sbr.rel (%p142) target = $region32
        $region31: #{tpu_custom_call.1} parent=27 // pred_region
          %145 = dma.done %s138, 512
        $region32: #{tpu_custom_call.1} parent=27 // pred_fallthru
          _
        %s146 = sand.u32 %s27, 1
        %s147 = scalar_lea.sflag [#allocation3], %s146
        %s148 = sand.u32 %s27, 1
        %s149 = smul.addr %s148, 32
        %s150 = scalar_lea.vmem [#allocation2], %s149
        %p151 = pneg %p40
        %p152 = pneg %p37
        %p153 = pneg %p61
        %p154 = pneg %p58
        %p155 = pneg %p87
        %p156 = pneg %p84
        %s157 = sand.u32 %s74, 1
        %s158 = scalar_lea.sflag [#allocation4], %s157
        %s159 = sand.u32 %s74, 1
        %s160 = smul.addr %s159, 64
        %s161 = scalar_lea.vmem [#allocation5], %s160
        %v162 = vld [vmem:[%s141] sm:$0xff]
        %v163 = vld [vmem:[%s141 + $0x8] sm:$0xff]
        %v164 = vld [vmem:[%s141 + $0x10] sm:$0xff]
        %v165 = vld [vmem:[%s141 + $0x18] sm:$0xff]
        %v166 = vld [vmem:[%s1] sm:$0xff]
        %v167 = vld [vmem:[%s1 + $0x8] sm:$0xff]
        %vm168 = vcmask 130048
        %v170 = vsel %vm168, %v162, 0
        %v173 = vsel %vm168, %v163, 0
        %v176 = vsel %vm168, %v164, 0
        %v179 = vsel %vm168, %v165, 0
        %181 = vmatprep.subr.mxu0 0.0
        %182 = vmatpush1.msra.mxu0 %v166
        %183 = vmatprep.subr.mxu0 0.0
        %184 = vmatpush1.msra.mxu0 %v167
        %185 = vmatprep.subr.mxu0 0.0
        %186 = vmatpush1.msra.mxu0 0.0
        %187 = vmatprep.subr.mxu0 0.0
        %188 = vmatpush1.msra.mxu0 0.0
        %189 = vmatprep.subr.mxu0 0.0
        %190 = vmatpush1.msra.mxu0 0.0
        %191 = vmatprep.subr.mxu0 0.0
        %192 = vmatpush1.msra.mxu0 0.0
        %193 = vmatprep.subr.mxu0 0.0
        %194 = vmatpush1.msra.mxu0 0.0
        %195 = vmatprep.subr.mxu0 0.0
        %196 = vmatpush1.msra.mxu0 0.0
        %197 = vmatprep.subr.mxu0 0.0
        %198 = vmatpush1.msra.mxu0 0.0
        %199 = vmatprep.subr.mxu0 0.0
        %200 = vmatpush1.msra.mxu0 0.0
        %201 = vmatprep.subr.mxu0 0.0
        %202 = vmatpush1.msra.mxu0 0.0
        %203 = vmatprep.subr.mxu0 0.0
        %204 = vmatpush1.msra.mxu0 0.0
        %205 = vmatprep.subr.mxu0 0.0
        %206 = vmatpush1.msra.mxu0 0.0
        %207 = vmatprep.subr.mxu0 0.0
        %208 = vmatpush1.msra.mxu0 0.0
        %209 = vmatprep.subr.mxu0 0.0
        %210 = vmatpush1.msra.mxu0 0.0
        %211 = vmatprep.subr.mxu0 0.0
        %212 = vmatpush1.msra.mxu0 0.0
        %213 = vmatprep.subr.mxu0 0.0
        %214 = vmatpush1.msra.mxu0 0.0
        %215 = vmatprep.subr.mxu0 0.0
        %216 = vmatpush1.msra.mxu0 0.0
        %217 = vmatprep.subr.mxu0 0.0
        %218 = vmatpush1.msra.mxu0 0.0
        %219 = vmatprep.subr.mxu0 0.0
        %220 = vmatpush1.msra.mxu0 0.0
        %221 = vmatprep.subr.mxu0 0.0
        %222 = vmatpush1.msra.mxu0 0.0
        %223 = vmatprep.subr.mxu0 0.0
        %224 = vmatpush1.msra.mxu0 0.0
        %225 = vmatprep.subr.mxu0 0.0
        %226 = vmatpush1.msra.mxu0 0.0
        %227 = vmatprep.subr.mxu0 0.0
        %228 = vmatpush1.msra.mxu0 0.0
        %229 = vmatprep.subr.mxu0 0.0
        %230 = vmatpush1.msra.mxu0 0.0
        %231 = vmatprep.subr.mxu0 0.0
        %232 = vmatpush1.msra.mxu0 0.0
        %233 = vmatprep.subr.mxu0 0.0
        %234 = vmatpush1.msra.mxu0 0.0
        %235 = vmatprep.subr.mxu0 0.0
        %236 = vmatpush1.msra.mxu0 0.0
        %237 = vmatprep.subr.mxu0 0.0
        %238 = vmatpush1.msra.mxu0 0.0
        %239 = vmatprep.subr.mxu0 0.0
        %240 = vmatpush1.msra.mxu0 0.0
        %241 = vmatprep.subr.mxu0 0.0
        %242 = vmatpush1.msra.mxu0 0.0
        %243 = vmatprep.subr.mxu0 0.0
        %244 = vmatpush1.msra.mxu0 0.0
        %245 = vmatprep.mubr.f32.mxu0 0.0
        %246 = vmatmul.mubr.f32.gmra.mrb[0].mxu0 %v170
        %v247 = vpop.f32.mrb[0].mxu0
        %v248 = vadd.f32 0.0, %v247
        %v249 = vpop.f32.mrb[0].mxu0
        %250 = vmatprep.mubr.f32.mxu0 0.0
        %251 = vmatmul.mubr.f32.gmra.mrb[0].mxu0 %v173
        %v252 = vpop.f32.mrb[0].mxu0
        %v253 = vadd.f32 0.0, %v252
        %v254 = vpop.f32.mrb[0].mxu0
        %255 = vmatprep.mubr.f32.mxu0 0.0
        %256 = vmatmul.mubr.f32.gmra.mrb[0].mxu0 %v176
        %v257 = vpop.f32.mrb[0].mxu0
        %v258 = vadd.f32 0.0, %v257
        %v259 = vpop.f32.mrb[0].mxu0
        %260 = vmatprep.mubr.f32.mxu0 0.0
        %261 = vmatmul.mubr.f32.gmra.mrb[0].mxu0 %v179
        %v262 = vpop.f32.mrb[0].mxu0
        %v263 = vadd.f32 0.0, %v262
        %v264 = vpop.f32.mrb[0].mxu0
        %265 = vdwg.mxu0
        %vm266 = vcmask 64512
        %267 = vst.msk [vmem:[%s161] sm:$0xff] %vm266, 0.0
        %268 = vst.msk [vmem:[%s161 + $0x8] sm:$0xff] %vm266, 0.0
        %269 = vst.msk [vmem:[%s161 + $0x10] sm:$0xff] %vm266, %v248
        %270 = vst.msk [vmem:[%s161 + $0x18] sm:$0xff] %vm266, %v253
        %271 = vst.msk [vmem:[%s161 + $0x20] sm:$0xff] %vm266, %v258
        %272 = vst.msk [vmem:[%s161 + $0x28] sm:$0xff] %vm266, %v263
        %273 = vst.msk [vmem:[%s161 + $0x30] sm:$0xff] %vm266, 0.0
        %274 = vst.msk [vmem:[%s161 + $0x38] sm:$0xff] %vm266, 0.0
        %s275 = sand.u32 %s74, 1
        %s276 = scalar_lea.sflag [#allocation4], %s275
        %s277 = sand.u32 %s74, 1
        %s278 = smul.addr %s277, 64
        %s279 = scalar_lea.vmem [#allocation5], %s278
        // Predicated region
        $region33: #{tpu_custom_call.1} parent=27 // pred_check
          %p280 = pneg %p84
        $region34: #{tpu_custom_call.1} parent=27 // pred_check_branch
          %282 = sbr.rel (%p280) target = $region36
        $region35: #{tpu_custom_call.1} parent=27 // pred_region
          %s284 = ssub.s32 1024, 1024
          %285 = vsyncadd %s276, %s284
          %s286 = smul.addr %s19, 8
          %s287 = smul.addr %s286, 128
          %s288 = scalar_lea.hbm %s2, %s287
          %s289 = sshll.u32 %s279, 4
          %s290 = int_to_ptr.vmem [resolvable:$true] %s289
          %295 = dma.vmem_to_hbm [thread:$0]  %s290, 1024, %s288, %s276, 128, 128, 8
        $region36: #{tpu_custom_call.1} parent=27 // pred_fallthru
          _
      $region28: #{tpu_custom_call.1} parent=5 // pred_fallthru
        _
      %p296 = scmp.le.s32.totalorder 2, %s14
      // Predicated region
      $region37: #{tpu_custom_call.1} parent=5 // pred_check
        %p297 = pneg %p296
      $region38: #{tpu_custom_call.1} parent=5 // pred_check_branch
        %299 = sbr.rel (%p297) target = $region40
      $region39: #{tpu_custom_call.1} parent=5 // pred_region
        %s300 = ssub.s32 %s14, 2
        // Predicated region
        $region41: #{tpu_custom_call.1} parent=39 // pred_check
          %p301 = pneg %p90
        $region42: #{tpu_custom_call.1} parent=39 // pred_check_branch
          %303 = sbr.rel (%p301) target = $region44
        $region43: #{tpu_custom_call.1} parent=39 // pred_region
          %s304 = sand.u32 %s75, 1
          %s305 = scalar_lea.sflag [#allocation4], %s304
          %s306 = sand.u32 %s75, 1
          %s307 = smul.addr %s306, 64
          %s308 = scalar_lea.vmem [#allocation5], %s307
          %309 = dma.done %s305, 1024
        $region44: #{tpu_custom_call.1} parent=39 // pred_fallthru
          _
      $region40: #{tpu_custom_call.1} parent=5 // pred_fallthru
        _
    $region6: #{tpu_custom_call.1} parent=1 // loop_footer
      %s18 = sadd.s32 1, %s14
    $region7: #{tpu_custom_call.1} parent=1 // loop_footer_branch
      %13 = sbr.rel target = $region3
    $region8: #{tpu_custom_call.1} parent=1 // loop_exit
      _
    %310 = vsyncpa [#allocation3], 1
    %s311 = scalar_lea.sflag [#allocation3], 1
    %312 = vsyncpa %s311, 1
    %313 = vsyncpa [#allocation4], 1
    %s314 = scalar_lea.sflag [#allocation4], 1
    %315 = vsyncpa %s314, 1

</llo_original>
